<compile_context>
chip_gen: v7x
topology: tpu7x:2x2x1
jax: 0.10.0
libtpu: 0.0.40
codegen_flags: <defaults>
</compile_context>

<pallas_src>
import functools

import jax
import jax.numpy as jnp
from jax.experimental import pallas as pl
from jax.experimental.pallas import tpu as pltpu


def _round_up(n, m):
    return ((n + m - 1) // m) * m


def _tensorcores_per_chip():
    """2 on v7x (megacore), 1 on v5e/v6e.  Best-effort, safe fallback = 1."""
    try:
        info = pltpu.get_tpu_info()
        for attr in ("num_cores", "tensorcores_per_chip", "cores_per_chip"):
            n = getattr(info, attr, None)
            if isinstance(n, int) and n > 0:
                return n
    except Exception:
        pass
    try:
        if "v7" in jax.devices()[0].device_kind.lower():
            return 2
    except Exception:
        pass
    return 1


def _choose_tile(B, tile_b, two_cores):
    # 128-aligned rows keep the lane-dense (tile//16, 128) output block
    # (8,128)-tileable even when the grid has several steps.
    ALIGN = 128
    tile = max(ALIGN, min(_round_up(tile_b, ALIGN), _round_up(B, ALIGN)))
    if two_cores and B > ALIGN:
        # Prefer an even number (>= 2) of grid steps so both TensorCores get
        # equal work on v7x.  On 1-TC chips this path is skipped (pure overhead).
        n_steps = pl.cdiv(_round_up(B, ALIGN), tile)
        if n_steps < 2 or n_steps % 2:
            n_steps += 1
        tile = max(ALIGN, _round_up(pl.cdiv(B, n_steps), ALIGN))
    return tile


# ----------------------------- Pallas kernel -------------------------------

def actor_mlp_kernel(x_ref, w1_ref, b1_ref, w2_ref, b2_ref, w3_ref, b3_ref,
                     prob_ref):
    """One batch-tile of the ActorMLP forward pass, fully fused in VMEM."""
    # Cast to bf16 here (VPU, free) instead of materializing a bf16 copy in HBM.
    x = x_ref[...].astype(jnp.bfloat16)                         # (TB, OBS)

    # fc1 + tanh: bf16 MXU inputs, f32 accumulation & elementwise.
    h1 = jnp.dot(x, w1_ref[...], preferred_element_type=jnp.float32)
    h1 = jnp.tanh(h1 + b1_ref[...])                             # (TB, H) f32

    # fc2 + tanh
    h2 = jnp.dot(h1.astype(jnp.bfloat16), w2_ref[...],
                 preferred_element_type=jnp.float32)
    h2 = jnp.tanh(h2 + b2_ref[...])                             # (TB, H) f32

    # fc3 + softmax(dim=-1), numerically stable; exact divide so rows sum to 1.
    logits = jnp.dot(h2.astype(jnp.bfloat16), w3_ref[...],
                     preferred_element_type=jnp.float32)
    logits = logits + b3_ref[...]                               # (TB, A) f32
    m = jnp.max(logits, axis=-1, keepdims=True)
    e = jnp.exp(logits - m)
    probs = e / jnp.sum(e, axis=-1, keepdims=True)

    # Lane-dense store: when the output block is (TB//PACK, A*PACK) this folds
    # PACK consecutive batch rows into one 128-lane row (unmasked vst + dense
    # HBM writeback).  When the block is (TB, A) the reshape is a no-op.
    prob_ref[...] = probs.reshape(prob_ref.shape).astype(prob_ref.dtype)


# ------------------------------ Wrapper ------------------------------------

@functools.partial(jax.jit, static_argnames=("tile_b", "pack_out"))
def _forward(x, params, *, tile_b, pack_out):
    w1, b1, w2, b2, w3, b3 = params
    B, obs_dim = x.shape
    hidden = w1.shape[1]
    act_dim = w3.shape[1]

    tile = _choose_tile(B, tile_b, _tensorcores_per_chip() >= 2)
    B_pad = _round_up(B, tile)
    grid = (B_pad // tile,)

    # Lane-dense output packing factor (16 for act_dim=8).
    pack = 128 // act_dim if (pack_out and act_dim < 128 and 128 % act_dim == 0) else 1

    if B_pad != B:
        x = jnp.pad(x, ((0, B_pad - B), (0, 0)))  # only materializes when needed

    # Weights are tiny -> cast once to bf16 here; x stays f32 (cast in-kernel).
    w1b, w2b, w3b = (w.astype(jnp.bfloat16) for w in (w1, w2, w3))

    full = lambda shape: pl.BlockSpec(shape, lambda i: (0, 0))

    cost = pl.CostEstimate(
        flops=2 * B_pad * (obs_dim * hidden + hidden * hidden + hidden * act_dim),
        transcendentals=B_pad * (2 * hidden + act_dim),
        bytes_accessed=4 * B_pad * (obs_dim + act_dim)
        + 2 * (w1b.size + w2b.size + w3b.size)
        + 4 * (b1.size + b2.size + b3.size),
    )

    out = pl.pallas_call(
        actor_mlp_kernel,
        out_shape=jax.ShapeDtypeStruct((B_pad // pack, act_dim * pack), jnp.float32),
        grid_spec=pltpu.PrefetchScalarGridSpec(
            num_scalar_prefetch=0,
            grid=grid,
            in_specs=[
                pl.BlockSpec((tile, obs_dim), lambda i: (i, 0)),  # x tile (f32)
                full((obs_dim, hidden)),                          # w1 (VMEM-resident)
                full((1, hidden)),                                # b1
                full((hidden, hidden)),                           # w2
                full((1, hidden)),                                # b2
                full((hidden, act_dim)),                          # w3
                full((1, act_dim)),                               # b3
            ],
            out_specs=pl.BlockSpec((tile // pack, act_dim * pack), lambda i: (i, 0)),
        ),
        compiler_params=pltpu.CompilerParams(
            dimension_semantics=("parallel",)),
        cost_estimate=cost,
    )(x, w1b, b1, w2b, b2, w3b, b3)

    # (B_pad//pack, act_dim*pack) -> (B_pad, act_dim) is contiguous -> free reshape.
    return out.reshape(B_pad, act_dim)[:B]


_PACK_OUTPUT_OK = None  # resolved on first call


def actor_mlp_forward(x, params, *, tile_b=4096):
    """x: (B, obs_dim) float32 -> probs: (B, action_dim) float32."""
    global _PACK_OUTPUT_OK
    if _PACK_OUTPUT_OK is None:
        try:
            out = jax.block_until_ready(_forward(x, params, tile_b=tile_b, pack_out=True))
            _PACK_OUTPUT_OK = True
            return out
        except Exception:
            # TODO(synk): drop this fallback once the (tile,8)->(tile//16,128)
            # in-kernel reshape is confirmed supported by the local Mosaic build.
            _PACK_OUTPUT_OK = False
    return _forward(x, params, tile_b=tile_b, pack_out=_PACK_OUTPUT_OK)


# ------------------------- Deterministic init ------------------------------

def orthogonal(key, rows, cols, gain=1.0, dtype=jnp.float32):
    """Orthogonal init equivalent to nn.init.orthogonal_ (up to RNG stream)."""
    n, m = max(rows, cols), min(rows, cols)
    a = jax.random.normal(key, (n, m), dtype=jnp.float32)
    q, r = jnp.linalg.qr(a)
    d = jnp.sign(jnp.diagonal(r))
    d = jnp.where(d == 0, 1.0, d)
    q = q * d[None, :]
    if rows < cols:
        q = q.T
    return (gain * q[:rows, :cols]).astype(dtype)


def make_params(key, obs_dim, hidden, act_dim):
    k1, k2, k3 = jax.random.split(key, 3)
    # PyTorch Linear weight is [out, in]; we store transposed [in, out].
    w1 = orthogonal(k1, hidden, obs_dim, gain=1.0).T      # (obs, hidden)
    w2 = orthogonal(k2, hidden, hidden, gain=1.0).T       # (hidden, hidden)
    w3 = orthogonal(k3, act_dim, hidden, gain=0.01).T     # (hidden, act)
    b1 = jnp.zeros((1, hidden), jnp.float32)
    b2 = jnp.zeros((1, hidden), jnp.float32)
    b3 = jnp.zeros((1, act_dim), jnp.float32)
    return w1, b1, w2, b2, w3, b3


def reference_forward(x, params):
    w1, b1, w2, b2, w3, b3 = params
    h1 = jnp.tanh(x @ w1 + b1)
    h2 = jnp.tanh(h1 @ w2 + b2)
    return jax.nn.softmax(h2 @ w3 + b3, axis=-1)


# --------------------------------- Main -------------------------------------

if __name__ == "__main__":
    OBS_DIM, HIDDEN, ACT_DIM = 32, 32, 8

    key = jax.random.PRNGKey(0)
    k_params, k_x1, k_x2 = jax.random.split(key, 3)
    params = make_params(k_params, OBS_DIM, HIDDEN, ACT_DIM)

    # Case 1: small batch (exercises zero-padding up to one 128-row tile).
    x1 = jax.random.normal(k_x1, (48, OBS_DIM), dtype=jnp.float32)
    p1 = jax.block_until_ready(actor_mlp_forward(x1, params))

    # Case 2: forces a multi-step grid (exercises the batch-tiling path).
    x2 = jax.random.normal(k_x2, (300, OBS_DIM), dtype=jnp.float32)
    p2 = jax.block_until_ready(actor_mlp_forward(x2, params, tile_b=128))

    for x, p in ((x1, p1), (x2, p2)):
        ref = reference_forward(x, params)
        assert p.shape == ref.shape
        # Exact divide in the kernel -> rows sum to 1 within f32 rounding.
        assert jnp.allclose(jnp.sum(p, axis=-1), 1.0, atol=1e-5)
        # bf16 MXU inputs -> relaxed tolerance vs the f32 reference.
        assert jnp.allclose(p, ref, atol=5e-3, rtol=5e-3)

    print("KERNEL_OK")
</pallas_src>

<mosaic_0001>
module attributes {stable_mosaic.version = 11 : i64} {
  func.func @actor_mlp_kernel(%arg0: i32, %arg1: memref<128x32xf32, #tpu.memory_space<vmem>>, %arg2: memref<32x32xbf16, #tpu.memory_space<vmem>>, %arg3: memref<1x32xf32, #tpu.memory_space<vmem>>, %arg4: memref<32x32xbf16, #tpu.memory_space<vmem>>, %arg5: memref<1x32xf32, #tpu.memory_space<vmem>>, %arg6: memref<32x8xbf16, #tpu.memory_space<vmem>>, %arg7: memref<1x8xf32, #tpu.memory_space<vmem>>, %arg8: memref<8x128xf32, #tpu.memory_space<vmem>>) attributes {dimension_semantics = [#tpu.dimension_semantics<parallel>], iteration_bounds = array<i64: 1>, scalar_prefetch = 0 : i64, scratch_operands = 0 : i64, tpu.core_type = #tpu.core_type<tc>, window_params = [{transform_indices = @transform_0, window_bounds = array<i64: 128, 32>}, {pipeline_mode = #tpu.pipeline_mode<synchronous>, transform_indices = @transform_1, window_bounds = array<i64: 32, 32>}, {pipeline_mode = #tpu.pipeline_mode<synchronous>, transform_indices = @transform_2, window_bounds = array<i64: 1, 32>}, {pipeline_mode = #tpu.pipeline_mode<synchronous>, transform_indices = @transform_3, window_bounds = array<i64: 32, 32>}, {pipeline_mode = #tpu.pipeline_mode<synchronous>, transform_indices = @transform_4, window_bounds = array<i64: 1, 32>}, {pipeline_mode = #tpu.pipeline_mode<synchronous>, transform_indices = @transform_5, window_bounds = array<i64: 32, 8>}, {pipeline_mode = #tpu.pipeline_mode<synchronous>, transform_indices = @transform_6, window_bounds = array<i64: 1, 8>}, {transform_indices = @transform_7, window_bounds = array<i64: 8, 128>}]} {
    %c0 = arith.constant 0 : index
    %c0_0 = arith.constant 0 : index
    %0 = vector.load %arg1[%c0, %c0_0] : memref<128x32xf32, #tpu.memory_space<vmem>>, vector<128x32xf32>
    %1 = arith.truncf %0 : vector<128x32xf32> to vector<128x32xbf16>
    %c0_1 = arith.constant 0 : index
    %c0_2 = arith.constant 0 : index
    %2 = vector.load %arg2[%c0_1, %c0_2] : memref<32x32xbf16, #tpu.memory_space<vmem>>, vector<32x32xbf16>
    %cst = arith.constant dense<0.000000e+00> : vector<128x32xf32>
    %3 = tpu.matmul %1, %2, %cst {dimension_numbers = #tpu.dot_dimension_numbers<[1], [0], [0], [1], [0, 0, 1, 1], [], []>} : vector<128x32xbf16>, vector<32x32xbf16>, vector<128x32xf32> -> vector<128x32xf32>
    %c0_3 = arith.constant 0 : index
    %c0_4 = arith.constant 0 : index
    %4 = vector.load %arg3[%c0_3, %c0_4] : memref<1x32xf32, #tpu.memory_space<vmem>>, vector<1x32xf32>
    %5 = vector.broadcast %4 : vector<1x32xf32> to vector<128x32xf32>
    %6 = arith.addf %3, %5 : vector<128x32xf32>
    %7 = math.tanh %6 : vector<128x32xf32>
    %8 = arith.truncf %7 : vector<128x32xf32> to vector<128x32xbf16>
    %c0_5 = arith.constant 0 : index
    %c0_6 = arith.constant 0 : index
    %9 = vector.load %arg4[%c0_5, %c0_6] : memref<32x32xbf16, #tpu.memory_space<vmem>>, vector<32x32xbf16>
    %cst_7 = arith.constant dense<0.000000e+00> : vector<128x32xf32>
    %10 = tpu.matmul %8, %9, %cst_7 {dimension_numbers = #tpu.dot_dimension_numbers<[1], [0], [0], [1], [0, 0, 1, 1], [], []>} : vector<128x32xbf16>, vector<32x32xbf16>, vector<128x32xf32> -> vector<128x32xf32>
    %c0_8 = arith.constant 0 : index
    %c0_9 = arith.constant 0 : index
    %11 = vector.load %arg5[%c0_8, %c0_9] : memref<1x32xf32, #tpu.memory_space<vmem>>, vector<1x32xf32>
    %12 = vector.broadcast %11 : vector<1x32xf32> to vector<128x32xf32>
    %13 = arith.addf %10, %12 : vector<128x32xf32>
    %14 = math.tanh %13 : vector<128x32xf32>
    %15 = arith.truncf %14 : vector<128x32xf32> to vector<128x32xbf16>
    %c0_10 = arith.constant 0 : index
    %c0_11 = arith.constant 0 : index
    %16 = vector.load %arg6[%c0_10, %c0_11] : memref<32x8xbf16, #tpu.memory_space<vmem>>, vector<32x8xbf16>
    %cst_12 = arith.constant dense<0.000000e+00> : vector<128x8xf32>
    %17 = tpu.matmul %15, %16, %cst_12 {dimension_numbers = #tpu.dot_dimension_numbers<[1], [0], [0], [1], [0, 0, 1, 1], [], []>} : vector<128x32xbf16>, vector<32x8xbf16>, vector<128x8xf32> -> vector<128x8xf32>
    %c0_13 = arith.constant 0 : index
    %c0_14 = arith.constant 0 : index
    %18 = vector.load %arg7[%c0_13, %c0_14] : memref<1x8xf32, #tpu.memory_space<vmem>>, vector<1x8xf32>
    %19 = vector.broadcast %18 : vector<1x8xf32> to vector<128x8xf32>
    %20 = arith.addf %17, %19 : vector<128x8xf32>
    %cst_15 = arith.constant dense<0xFF800000> : vector<128xf32>
    %21 = vector.multi_reduction <maximumf>, %20, %cst_15 [1] : vector<128x8xf32> to vector<128xf32>
    %22 = vector.shape_cast %21 : vector<128xf32> to vector<128x1xf32>
    %23 = vector.broadcast %22 : vector<128x1xf32> to vector<128x8xf32>
    %24 = arith.subf %20, %23 : vector<128x8xf32>
    %25 = math.exp %24 : vector<128x8xf32>
    %cst_16 = arith.constant dense<0.000000e+00> : vector<128xf32>
    %26 = vector.multi_reduction <add>, %25, %cst_16 [1] : vector<128x8xf32> to vector<128xf32>
    %27 = vector.shape_cast %26 : vector<128xf32> to vector<128x1xf32>
    %28 = vector.broadcast %27 : vector<128x1xf32> to vector<128x8xf32>
    %29 = arith.divf %25, %28 : vector<128x8xf32>
    %30 = vector.shape_cast %29 : vector<128x8xf32> to vector<8x128xf32>
    %c0_17 = arith.constant 0 : index
    %c0_18 = arith.constant 0 : index
    %31 = vector.load %arg8[%c0_17, %c0_18] : memref<8x128xf32, #tpu.memory_space<vmem>>, vector<8x128xf32>
    tpu.vector_store %arg8[%c0_17, %c0_18], %30 {strides = array<i32>} : memref<8x128xf32, #tpu.memory_space<vmem>>, vector<8x128xf32>,
    return
  }
  func.func @transform_0(%arg0: i32) -> (i32, i32) {
    %c0_i32 = arith.constant 0 : i32
    %c0_i32_0 = arith.constant 0 : i32
    return %arg0, %c0_i32 : i32, i32
  }
  func.func @transform_1(%arg0: i32) -> (i32, i32) {
    %c0_i32 = arith.constant 0 : i32
    %c0_i32_0 = arith.constant 0 : i32
    %c0_i32_1 = arith.constant 0 : i32
    return %c0_i32, %c0_i32_0 : i32, i32
  }
  func.func @transform_2(%arg0: i32) -> (i32, i32) {
    %c0_i32 = arith.constant 0 : i32
    %c0_i32_0 = arith.constant 0 : i32
    %c0_i32_1 = arith.constant 0 : i32
    return %c0_i32, %c0_i32_0 : i32, i32
  }
  func.func @transform_3(%arg0: i32) -> (i32, i32) {
    %c0_i32 = arith.constant 0 : i32
    %c0_i32_0 = arith.constant 0 : i32
    %c0_i32_1 = arith.constant 0 : i32
    return %c0_i32, %c0_i32_0 : i32, i32
  }
  func.func @transform_4(%arg0: i32) -> (i32, i32) {
    %c0_i32 = arith.constant 0 : i32
    %c0_i32_0 = arith.constant 0 : i32
    %c0_i32_1 = arith.constant 0 : i32
    return %c0_i32, %c0_i32_0 : i32, i32
  }
  func.func @transform_5(%arg0: i32) -> (i32, i32) {
    %c0_i32 = arith.constant 0 : i32
    %c0_i32_0 = arith.constant 0 : i32
    %c0_i32_1 = arith.constant 0 : i32
    return %c0_i32, %c0_i32_0 : i32, i32
  }
  func.func @transform_6(%arg0: i32) -> (i32, i32) {
    %c0_i32 = arith.constant 0 : i32
    %c0_i32_0 = arith.constant 0 : i32
    %c0_i32_1 = arith.constant 0 : i32
    return %c0_i32, %c0_i32_0 : i32, i32
  }
  func.func @transform_7(%arg0: i32) -> (i32, i32) {
    %c0_i32 = arith.constant 0 : i32
    %c0_i32_0 = arith.constant 0 : i32
    return %arg0, %c0_i32 : i32, i32
  }
}

module attributes {stable_mosaic.version = 11 : i64} {
  func.func @actor_mlp_kernel(%arg0: i32, %arg1: memref<128x32xf32, #tpu.memory_space<vmem>>, %arg2: memref<32x32xbf16, #tpu.memory_space<vmem>>, %arg3: memref<1x32xf32, #tpu.memory_space<vmem>>, %arg4: memref<32x32xbf16, #tpu.memory_space<vmem>>, %arg5: memref<1x32xf32, #tpu.memory_space<vmem>>, %arg6: memref<32x8xbf16, #tpu.memory_space<vmem>>, %arg7: memref<1x8xf32, #tpu.memory_space<vmem>>, %arg8: memref<128x8xf32, #tpu.memory_space<vmem>>) attributes {dimension_semantics = [#tpu.dimension_semantics<parallel>], iteration_bounds = array<i64: 1>, scalar_prefetch = 0 : i64, scratch_operands = 0 : i64, tpu.core_type = #tpu.core_type<tc>, window_params = [{transform_indices = @transform_0, window_bounds = array<i64: 128, 32>}, {pipeline_mode = #tpu.pipeline_mode<synchronous>, transform_indices = @transform_1, window_bounds = array<i64: 32, 32>}, {pipeline_mode = #tpu.pipeline_mode<synchronous>, transform_indices = @transform_2, window_bounds = array<i64: 1, 32>}, {pipeline_mode = #tpu.pipeline_mode<synchronous>, transform_indices = @transform_3, window_bounds = array<i64: 32, 32>}, {pipeline_mode = #tpu.pipeline_mode<synchronous>, transform_indices = @transform_4, window_bounds = array<i64: 1, 32>}, {pipeline_mode = #tpu.pipeline_mode<synchronous>, transform_indices = @transform_5, window_bounds = array<i64: 32, 8>}, {pipeline_mode = #tpu.pipeline_mode<synchronous>, transform_indices = @transform_6, window_bounds = array<i64: 1, 8>}, {transform_indices = @transform_7, window_bounds = array<i64: 128, 8>}]} {
    %c0 = arith.constant 0 : index
    %c0_0 = arith.constant 0 : index
    %0 = vector.load %arg1[%c0, %c0_0] : memref<128x32xf32, #tpu.memory_space<vmem>>, vector<128x32xf32>
    %1 = arith.truncf %0 : vector<128x32xf32> to vector<128x32xbf16>
    %c0_1 = arith.constant 0 : index
    %c0_2 = arith.constant 0 : index
    %2 = vector.load %arg2[%c0_1, %c0_2] : memref<32x32xbf16, #tpu.memory_space<vmem>>, vector<32x32xbf16>
    %cst = arith.constant dense<0.000000e+00> : vector<128x32xf32>
    %3 = tpu.matmul %1, %2, %cst {dimension_numbers = #tpu.dot_dimension_numbers<[1], [0], [0], [1], [0, 0, 1, 1], [], []>} : vector<128x32xbf16>, vector<32x32xbf16>, vector<128x32xf32> -> vector<128x32xf32>
    %c0_3 = arith.constant 0 : index
    %c0_4 = arith.constant 0 : index
    %4 = vector.load %arg3[%c0_3, %c0_4] : memref<1x32xf32, #tpu.memory_space<vmem>>, vector<1x32xf32>
    %5 = vector.broadcast %4 : vector<1x32xf32> to vector<128x32xf32>
    %6 = arith.addf %3, %5 : vector<128x32xf32>
    %7 = math.tanh %6 : vector<128x32xf32>
    %8 = arith.truncf %7 : vector<128x32xf32> to vector<128x32xbf16>
    %c0_5 = arith.constant 0 : index
    %c0_6 = arith.constant 0 : index
    %9 = vector.load %arg4[%c0_5, %c0_6] : memref<32x32xbf16, #tpu.memory_space<vmem>>, vector<32x32xbf16>
    %cst_7 = arith.constant dense<0.000000e+00> : vector<128x32xf32>
    %10 = tpu.matmul %8, %9, %cst_7 {dimension_numbers = #tpu.dot_dimension_numbers<[1], [0], [0], [1], [0, 0, 1, 1], [], []>} : vector<128x32xbf16>, vector<32x32xbf16>, vector<128x32xf32> -> vector<128x32xf32>
    %c0_8 = arith.constant 0 : index
    %c0_9 = arith.constant 0 : index
    %11 = vector.load %arg5[%c0_8, %c0_9] : memref<1x32xf32, #tpu.memory_space<vmem>>, vector<1x32xf32>
    %12 = vector.broadcast %11 : vector<1x32xf32> to vector<128x32xf32>
    %13 = arith.addf %10, %12 : vector<128x32xf32>
    %14 = math.tanh %13 : vector<128x32xf32>
    %15 = arith.truncf %14 : vector<128x32xf32> to vector<128x32xbf16>
    %c0_10 = arith.constant 0 : index
    %c0_11 = arith.constant 0 : index
    %16 = vector.load %arg6[%c0_10, %c0_11] : memref<32x8xbf16, #tpu.memory_space<vmem>>, vector<32x8xbf16>
    %cst_12 = arith.constant dense<0.000000e+00> : vector<128x8xf32>
    %17 = tpu.matmul %15, %16, %cst_12 {dimension_numbers = #tpu.dot_dimension_numbers<[1], [0], [0], [1], [0, 0, 1, 1], [], []>} : vector<128x32xbf16>, vector<32x8xbf16>, vector<128x8xf32> -> vector<128x8xf32>
    %c0_13 = arith.constant 0 : index
    %c0_14 = arith.constant 0 : index
    %18 = vector.load %arg7[%c0_13, %c0_14] : memref<1x8xf32, #tpu.memory_space<vmem>>, vector<1x8xf32>
    %19 = vector.broadcast %18 : vector<1x8xf32> to vector<128x8xf32>
    %20 = arith.addf %17, %19 : vector<128x8xf32>
    %cst_15 = arith.constant dense<0xFF800000> : vector<128xf32>
    %21 = vector.multi_reduction <maximumf>, %20, %cst_15 [1] : vector<128x8xf32> to vector<128xf32>
    %22 = vector.shape_cast %21 : vector<128xf32> to vector<128x1xf32>
    %23 = vector.broadcast %22 : vector<128x1xf32> to vector<128x8xf32>
    %24 = arith.subf %20, %23 : vector<128x8xf32>
    %25 = math.exp %24 : vector<128x8xf32>
    %cst_16 = arith.constant dense<0.000000e+00> : vector<128xf32>
    %26 = vector.multi_reduction <add>, %25, %cst_16 [1] : vector<128x8xf32> to vector<128xf32>
    %27 = vector.shape_cast %26 : vector<128xf32> to vector<128x1xf32>
    %28 = vector.broadcast %27 : vector<128x1xf32> to vector<128x8xf32>
    %29 = arith.divf %25, %28 : vector<128x8xf32>
    %c0_17 = arith.constant 0 : index
    %c0_18 = arith.constant 0 : index
    %30 = vector.load %arg8[%c0_17, %c0_18] : memref<128x8xf32, #tpu.memory_space<vmem>>, vector<128x8xf32>
    tpu.vector_store %arg8[%c0_17, %c0_18], %29 {strides = array<i32>} : memref<128x8xf32, #tpu.memory_space<vmem>>, vector<128x8xf32>,
    return
  }
  func.func @transform_0(%arg0: i32) -> (i32, i32) {
    %c0_i32 = arith.constant 0 : i32
    %c0_i32_0 = arith.constant 0 : i32
    return %arg0, %c0_i32 : i32, i32
  }
  func.func @transform_1(%arg0: i32) -> (i32, i32) {
    %c0_i32 = arith.constant 0 : i32
    %c0_i32_0 = arith.constant 0 : i32
    %c0_i32_1 = arith.constant 0 : i32
    return %c0_i32, %c0_i32_0 : i32, i32
  }
  func.func @transform_2(%arg0: i32) -> (i32, i32) {
    %c0_i32 = arith.constant 0 : i32
    %c0_i32_0 = arith.constant 0 : i32
    %c0_i32_1 = arith.constant 0 : i32
    return %c0_i32, %c0_i32_0 : i32, i32
  }
  func.func @transform_3(%arg0: i32) -> (i32, i32) {
    %c0_i32 = arith.constant 0 : i32
    %c0_i32_0 = arith.constant 0 : i32
    %c0_i32_1 = arith.constant 0 : i32
    return %c0_i32, %c0_i32_0 : i32, i32
  }
  func.func @transform_4(%arg0: i32) -> (i32, i32) {
    %c0_i32 = arith.constant 0 : i32
    %c0_i32_0 = arith.constant 0 : i32
    %c0_i32_1 = arith.constant 0 : i32
    return %c0_i32, %c0_i32_0 : i32, i32
  }
  func.func @transform_5(%arg0: i32) -> (i32, i32) {
    %c0_i32 = arith.constant 0 : i32
    %c0_i32_0 = arith.constant 0 : i32
    %c0_i32_1 = arith.constant 0 : i32
    return %c0_i32, %c0_i32_0 : i32, i32
  }
  func.func @transform_6(%arg0: i32) -> (i32, i32) {
    %c0_i32 = arith.constant 0 : i32
    %c0_i32_0 = arith.constant 0 : i32
    %c0_i32_1 = arith.constant 0 : i32
    return %c0_i32, %c0_i32_0 : i32, i32
  }
  func.func @transform_7(%arg0: i32) -> (i32, i32) {
    %c0_i32 = arith.constant 0 : i32
    %c0_i32_0 = arith.constant 0 : i32
    return %arg0, %c0_i32 : i32, i32
  }
}

</mosaic_0001>

<llo_original>
// kernel: _forward.1
$region0: #{_forward.1}
  #allocation0 [shape = 'u32[]', space=smem, size = 0x4, offset = 0x4, fixed_abs, tag = 'smem constant byte address 0x4 - core index']
  #allocation1 [shape = 'u32[144,128]{1,0:T(1,128)}', space=vmem, size = 0x12000, scoped, tag = 'internal scratch']
  %s0 = inlined_call_operand.vmem [shape: f32[128,32], index: 0, kind: input, shape index: {}]
  %s1 = inlined_call_operand.vmem [shape: bf16[32,32], index: 1, kind: input, shape index: {}]
  %s2 = inlined_call_operand.vmem [shape: f32[1,32], index: 2, kind: input, shape index: {}]
  %s3 = inlined_call_operand.vmem [shape: bf16[32,32], index: 3, kind: input, shape index: {}]
  %s4 = inlined_call_operand.vmem [shape: f32[1,32], index: 4, kind: input, shape index: {}]
  %s5 = inlined_call_operand.vmem [shape: bf16[32,8], index: 5, kind: input, shape index: {}]
  %s6 = inlined_call_operand.vmem [shape: f32[1,8], index: 6, kind: input, shape index: {}]
  %s7 = inlined_call_operand.vmem [shape: f32[128,8], index: 7, kind: output, shape index: {}]
  %s8 = sld [smem:[#allocation0]]
  $region38: #{_forward.1} parent=0
    _
  %s10 = ssub.s32 1, %s8
  %s11 = scalar_select 0, %s10, %s8
  // Predicated region
  $region2: #{_forward.1} parent=0 // pred_check
    _
  $region3: #{_forward.1} parent=0 // pred_check_branch
    %13 = sbr.rel (0) target = $region5
  $region4: #{_forward.1} parent=0 // pred_region
    _
  $region5: #{_forward.1} parent=0 // pred_fallthru
    _
  // Predicated region
  $region6: #{_forward.1} parent=0 // pred_check
    _
  $region7: #{_forward.1} parent=0 // pred_check_branch
    %15 = sbr.rel (0) target = $region9
  $region8: #{_forward.1} parent=0 // pred_region
    _
  $region9: #{_forward.1} parent=0 // pred_fallthru
    _
  // Predicated region
  $region10: #{_forward.1} parent=0 // pred_check
    _
  $region11: #{_forward.1} parent=0 // pred_check_branch
    %17 = sbr.rel (0) target = $region13
  $region12: #{_forward.1} parent=0 // pred_region
    _
  $region13: #{_forward.1} parent=0 // pred_fallthru
    _
  // Predicated region
  $region14: #{_forward.1} parent=0 // pred_check
    _
  $region15: #{_forward.1} parent=0 // pred_check_branch
    %19 = sbr.rel (0) target = $region17
  $region16: #{_forward.1} parent=0 // pred_region
    _
  $region17: #{_forward.1} parent=0 // pred_fallthru
    _
  // Predicated region
  $region18: #{_forward.1} parent=0 // pred_check
    _
  $region19: #{_forward.1} parent=0 // pred_check_branch
    %21 = sbr.rel (0) target = $region21
  $region20: #{_forward.1} parent=0 // pred_region
    _
  $region21: #{_forward.1} parent=0 // pred_fallthru
    _
  // Predicated region
  $region22: #{_forward.1} parent=0 // pred_check
    _
  $region23: #{_forward.1} parent=0 // pred_check_branch
    %23 = sbr.rel (0) target = $region25
  $region24: #{_forward.1} parent=0 // pred_region
    _
  $region25: #{_forward.1} parent=0 // pred_fallthru
    _
  // Predicated region
  $region26: #{_forward.1} parent=0 // pred_check
    _
  $region27: #{_forward.1} parent=0 // pred_check_branch
    %25 = sbr.rel (0) target = $region29
  $region28: #{_forward.1} parent=0 // pred_region
    _
  $region29: #{_forward.1} parent=0 // pred_fallthru
    _
  %v27 = vld [vmem:[%s0] sm:$0xff]
  %v28 = vld [vmem:[%s0 + $0x8] sm:$0xff]
  %v29 = vld [vmem:[%s0 + $0x10] sm:$0xff]
  %v30 = vld [vmem:[%s0 + $0x18] sm:$0xff]
  %v31 = vld [vmem:[%s0 + $0x20] sm:$0xff]
  %v32 = vld [vmem:[%s0 + $0x28] sm:$0xff]
  %v33 = vld [vmem:[%s0 + $0x30] sm:$0xff]
  %v34 = vld [vmem:[%s0 + $0x38] sm:$0xff]
  %v35 = vld [vmem:[%s0 + $0x40] sm:$0xff]
  %v36 = vld [vmem:[%s0 + $0x48] sm:$0xff]
  %v37 = vld [vmem:[%s0 + $0x50] sm:$0xff]
  %v38 = vld [vmem:[%s0 + $0x58] sm:$0xff]
  %v39 = vld [vmem:[%s0 + $0x60] sm:$0xff]
  %v40 = vld [vmem:[%s0 + $0x68] sm:$0xff]
  %v41 = vld [vmem:[%s0 + $0x70] sm:$0xff]
  %v42 = vld [vmem:[%s0 + $0x78] sm:$0xff]
  %v43 = vpack.c.bf16 %v28, %v27
  %v44 = vpack.c.bf16 %v30, %v29
  %v45 = vpack.c.bf16 %v32, %v31
  %v46 = vpack.c.bf16 %v34, %v33
  %v47 = vpack.c.bf16 %v36, %v35
  %v48 = vpack.c.bf16 %v38, %v37
  %v49 = vpack.c.bf16 %v40, %v39
  %v50 = vpack.c.bf16 %v42, %v41
  %v51 = vld [vmem:[%s1] sm:$0xf]
  %v52 = vld [vmem:[%s1 + $0x4] sm:$0xf]
  %v53 = vld [vmem:[%s1 + $0x8] sm:$0xf]
  %v54 = vld [vmem:[%s1 + $0xc] sm:$0xf]
  %v55 = vld [vmem:[%s2] sm:$0x1]
  %v57 = vlaneseq
  %v58 = vshrl.u32 %v57, 7
  %v59 = vsub.s32 0, %v58
  %v60 = vrot.slane %v55, %v59
  %v66 = vunpack.c.l.b16 %v51
  %v67 = vunpack.c.l.b16 %v52
  %v68 = vunpack.c.l.b16 %v53
  %v69 = vunpack.c.l.b16 %v54
  %v70 = vpack.c.b16 %v67, %v66
  %v71 = vpack.c.b16 %v69, %v68
  %vm74 = vcmask 261120
  %v76 = vsel %vm74, %v43, 0
  %v79 = vsel %vm74, %v44, 0
  %v82 = vsel %vm74, %v45, 0
  %v85 = vsel %vm74, %v46, 0
  %v88 = vsel %vm74, %v47, 0
  %v91 = vsel %vm74, %v48, 0
  %v94 = vsel %vm74, %v49, 0
  %v97 = vsel %vm74, %v50, 0
  %99 = vmatprep.subr.bf16.mxu0 0
  %100 = vmatpush1.bf16.msra.mxu0 %v70
  %101 = vmatprep.subr.bf16.mxu0 0
  %102 = vmatpush1.bf16.msra.mxu0 %v71
  %103 = vmatprep.subr.bf16.mxu0 0
  %104 = vmatpush1.bf16.msra.mxu0 0
  %105 = vmatprep.subr.bf16.mxu0 0
  %106 = vmatpush1.bf16.msra.mxu0 0
  %107 = vmatprep.subr.bf16.mxu0 0
  %108 = vmatpush1.bf16.msra.mxu0 0
  %109 = vmatprep.subr.bf16.mxu0 0
  %110 = vmatpush1.bf16.msra.mxu0 0
  %111 = vmatprep.subr.bf16.mxu0 0
  %112 = vmatpush1.bf16.msra.mxu0 0
  %113 = vmatprep.subr.bf16.mxu0 0
  %114 = vmatpush1.bf16.msra.mxu0 0
  %115 = vmatprep.subr.bf16.mxu0 0
  %116 = vmatpush1.bf16.msra.mxu0 0
  %117 = vmatprep.subr.bf16.mxu0 0
  %118 = vmatpush1.bf16.msra.mxu0 0
  %119 = vmatprep.subr.bf16.mxu0 0
  %120 = vmatpush1.bf16.msra.mxu0 0
  %121 = vmatprep.subr.bf16.mxu0 0
  %122 = vmatpush1.bf16.msra.mxu0 0
  %123 = vmatprep.subr.bf16.mxu0 0
  %124 = vmatpush1.bf16.msra.mxu0 0
  %125 = vmatprep.subr.bf16.mxu0 0
  %126 = vmatpush1.bf16.msra.mxu0 0
  %127 = vmatprep.subr.bf16.mxu0 0
  %128 = vmatpush1.bf16.msra.mxu0 0
  %129 = vmatprep.subr.bf16.mxu0 0
  %130 = vmatpush1.bf16.msra.mxu0 0
  %131 = vmatprep.mubr.bf16.mxu0 0
  %132 = vmatmul.mubr.bf16.gmra.mrb[0].mxu0 %v76
  %v133 = vpop.f32.mrb[0].mxu0
  %v134 = vadd.f32 %v60, %v133
  %v135 = vpop.f32.mrb[0].mxu0
  %v136 = vpop.f32.mrb[0].mxu0
  %v137 = vadd.f32 %v60, %v136
  %v138 = vpop.f32.mrb[0].mxu0
  %139 = vmatprep.mubr.bf16.mxu0 0
  %140 = vmatmul.mubr.bf16.gmra.mrb[0].mxu0 %v79
  %v141 = vpop.f32.mrb[0].mxu0
  %v142 = vadd.f32 %v60, %v141
  %v143 = vpop.f32.mrb[0].mxu0
  %v144 = vpop.f32.mrb[0].mxu0
  %v145 = vadd.f32 %v60, %v144
  %v146 = vpop.f32.mrb[0].mxu0
  %147 = vmatprep.mubr.bf16.mxu0 0
  %148 = vmatmul.mubr.bf16.gmra.mrb[0].mxu0 %v82
  %v149 = vpop.f32.mrb[0].mxu0
  %v150 = vadd.f32 %v60, %v149
  %v151 = vpop.f32.mrb[0].mxu0
  %v152 = vpop.f32.mrb[0].mxu0
  %v153 = vadd.f32 %v60, %v152
  %v154 = vpop.f32.mrb[0].mxu0
  %155 = vmatprep.mubr.bf16.mxu0 0
  %156 = vmatmul.mubr.bf16.gmra.mrb[0].mxu0 %v85
  %v157 = vpop.f32.mrb[0].mxu0
  %v158 = vadd.f32 %v60, %v157
  %v159 = vpop.f32.mrb[0].mxu0
  %v160 = vpop.f32.mrb[0].mxu0
  %v161 = vadd.f32 %v60, %v160
  %v162 = vpop.f32.mrb[0].mxu0
  %163 = vmatprep.mubr.bf16.mxu0 0
  %164 = vmatmul.mubr.bf16.gmra.mrb[0].mxu0 %v88
  %v165 = vpop.f32.mrb[0].mxu0
  %v166 = vadd.f32 %v60, %v165
  %v167 = vpop.f32.mrb[0].mxu0
  %v168 = vpop.f32.mrb[0].mxu0
  %v169 = vadd.f32 %v60, %v168
  %v170 = vpop.f32.mrb[0].mxu0
  %171 = vmatprep.mubr.bf16.mxu0 0
  %172 = vmatmul.mubr.bf16.gmra.mrb[0].mxu0 %v91
  %v173 = vpop.f32.mrb[0].mxu0
  %v174 = vadd.f32 %v60, %v173
  %v175 = vpop.f32.mrb[0].mxu0
  %v176 = vpop.f32.mrb[0].mxu0
  %v177 = vadd.f32 %v60, %v176
  %v178 = vpop.f32.mrb[0].mxu0
  %179 = vmatprep.mubr.bf16.mxu0 0
  %180 = vmatmul.mubr.bf16.gmra.mrb[0].mxu0 %v94
  %v181 = vpop.f32.mrb[0].mxu0
  %v182 = vadd.f32 %v60, %v181
  %v183 = vpop.f32.mrb[0].mxu0
  %v184 = vpop.f32.mrb[0].mxu0
  %v185 = vadd.f32 %v60, %v184
  %v186 = vpop.f32.mrb[0].mxu0
  %187 = vmatprep.mubr.bf16.mxu0 0
  %188 = vmatmul.mubr.bf16.gmra.mrb[0].mxu0 %v97
  %v189 = vpop.f32.mrb[0].mxu0
  %v190 = vadd.f32 %v60, %v189
  %v191 = vpop.f32.mrb[0].mxu0
  %v192 = vpop.f32.mrb[0].mxu0
  %v193 = vadd.f32 %v60, %v192
  %v194 = vpop.f32.mrb[0].mxu0
  %195 = vdwg.mxu0
  %v196 = vtanh.pop %v134
  %v197 = vtanh.pop %v137
  %v198 = vtanh.pop %v142
  %v199 = vtanh.pop %v145
  %v200 = vtanh.pop %v150
  %v201 = vtanh.pop %v153
  %v202 = vtanh.pop %v158
  %v203 = vtanh.pop %v161
  %v204 = vtanh.pop %v166
  %v205 = vtanh.pop %v169
  %v206 = vtanh.pop %v174
  %v207 = vtanh.pop %v177
  %v208 = vtanh.pop %v182
  %v209 = vtanh.pop %v185
  %v210 = vtanh.pop %v190
  %v211 = vtanh.pop %v193
  %v212 = vpack.c.bf16 %v197, %v196
  %v213 = vpack.c.bf16 %v199, %v198
  %v214 = vpack.c.bf16 %v201, %v200
  %v215 = vpack.c.bf16 %v203, %v202
  %v216 = vpack.c.bf16 %v205, %v204
  %v217 = vpack.c.bf16 %v207, %v206
  %v218 = vpack.c.bf16 %v209, %v208
  %v219 = vpack.c.bf16 %v211, %v210
  %v220 = vld [vmem:[%s3] sm:$0xf]
  %v221 = vld [vmem:[%s3 + $0x4] sm:$0xf]
  %v222 = vld [vmem:[%s3 + $0x8] sm:$0xf]
  %v223 = vld [vmem:[%s3 + $0xc] sm:$0xf]
  %v224 = vld [vmem:[%s4] sm:$0x1]
  %v226 = vlaneseq
  %v227 = vshrl.u32 %v226, 7
  %v228 = vsub.s32 0, %v227
  %v229 = vrot.slane %v224, %v228
  %v235 = vunpack.c.l.b16 %v220
  %v236 = vunpack.c.l.b16 %v221
  %v237 = vunpack.c.l.b16 %v222
  %v238 = vunpack.c.l.b16 %v223
  %v239 = vpack.c.b16 %v236, %v235
  %v240 = vpack.c.b16 %v238, %v237
  %v244 = vsel %vm74, %v212, 0
  %v247 = vsel %vm74, %v213, 0
  %v250 = vsel %vm74, %v214, 0
  %v253 = vsel %vm74, %v215, 0
  %v256 = vsel %vm74, %v216, 0
  %v259 = vsel %vm74, %v217, 0
  %v262 = vsel %vm74, %v218, 0
  %v265 = vsel %vm74, %v219, 0
  %267 = vmatprep.subr.bf16.mxu0 0
  %268 = vmatpush1.bf16.msra.mxu0 %v239
  %269 = vmatprep.subr.bf16.mxu0 0
  %270 = vmatpush1.bf16.msra.mxu0 %v240
  %271 = vmatprep.subr.bf16.mxu0 0
  %272 = vmatpush1.bf16.msra.mxu0 0
  %273 = vmatprep.subr.bf16.mxu0 0
  %274 = vmatpush1.bf16.msra.mxu0 0
  %275 = vmatprep.subr.bf16.mxu0 0
  %276 = vmatpush1.bf16.msra.mxu0 0
  %277 = vmatprep.subr.bf16.mxu0 0
  %278 = vmatpush1.bf16.msra.mxu0 0
  %279 = vmatprep.subr.bf16.mxu0 0
  %280 = vmatpush1.bf16.msra.mxu0 0
  %281 = vmatprep.subr.bf16.mxu0 0
  %282 = vmatpush1.bf16.msra.mxu0 0
  %283 = vmatprep.subr.bf16.mxu0 0
  %284 = vmatpush1.bf16.msra.mxu0 0
  %285 = vmatprep.subr.bf16.mxu0 0
  %286 = vmatpush1.bf16.msra.mxu0 0
  %287 = vmatprep.subr.bf16.mxu0 0
  %288 = vmatpush1.bf16.msra.mxu0 0
  %289 = vmatprep.subr.bf16.mxu0 0
  %290 = vmatpush1.bf16.msra.mxu0 0
  %291 = vmatprep.subr.bf16.mxu0 0
  %292 = vmatpush1.bf16.msra.mxu0 0
  %293 = vmatprep.subr.bf16.mxu0 0
  %294 = vmatpush1.bf16.msra.mxu0 0
  %295 = vmatprep.subr.bf16.mxu0 0
  %296 = vmatpush1.bf16.msra.mxu0 0
  %297 = vmatprep.subr.bf16.mxu0 0
  %298 = vmatpush1.bf16.msra.mxu0 0
  %299 = vmatprep.mubr.bf16.mxu0 0
  %300 = vmatmul.mubr.bf16.gmra.mrb[0].mxu0 %v244
  %v301 = vpop.f32.mrb[0].mxu0
  %v302 = vadd.f32 %v229, %v301
  %v303 = vpop.f32.mrb[0].mxu0
  %v304 = vpop.f32.mrb[0].mxu0
  %v305 = vadd.f32 %v229, %v304
  %v306 = vpop.f32.mrb[0].mxu0
  %307 = vmatprep.mubr.bf16.mxu0 0
  %308 = vmatmul.mubr.bf16.gmra.mrb[0].mxu0 %v247
  %v309 = vpop.f32.mrb[0].mxu0
  %v310 = vadd.f32 %v229, %v309
  %v311 = vpop.f32.mrb[0].mxu0
  %v312 = vpop.f32.mrb[0].mxu0
  %v313 = vadd.f32 %v229, %v312
  %v314 = vpop.f32.mrb[0].mxu0
  %315 = vmatprep.mubr.bf16.mxu0 0
  %316 = vmatmul.mubr.bf16.gmra.mrb[0].mxu0 %v250
  %v317 = vpop.f32.mrb[0].mxu0
  %v318 = vadd.f32 %v229, %v317
  %v319 = vpop.f32.mrb[0].mxu0
  %v320 = vpop.f32.mrb[0].mxu0
  %v321 = vadd.f32 %v229, %v320
  %v322 = vpop.f32.mrb[0].mxu0
  %323 = vmatprep.mubr.bf16.mxu0 0
  %324 = vmatmul.mubr.bf16.gmra.mrb[0].mxu0 %v253
  %v325 = vpop.f32.mrb[0].mxu0
  %v326 = vadd.f32 %v229, %v325
  %v327 = vpop.f32.mrb[0].mxu0
  %v328 = vpop.f32.mrb[0].mxu0
  %v329 = vadd.f32 %v229, %v328
  %v330 = vpop.f32.mrb[0].mxu0
  %331 = vmatprep.mubr.bf16.mxu0 0
  %332 = vmatmul.mubr.bf16.gmra.mrb[0].mxu0 %v256
  %v333 = vpop.f32.mrb[0].mxu0
  %v334 = vadd.f32 %v229, %v333
  %v335 = vpop.f32.mrb[0].mxu0
  %v336 = vpop.f32.mrb[0].mxu0
  %v337 = vadd.f32 %v229, %v336
  %v338 = vpop.f32.mrb[0].mxu0
  %339 = vmatprep.mubr.bf16.mxu0 0
  %340 = vmatmul.mubr.bf16.gmra.mrb[0].mxu0 %v259
  %v341 = vpop.f32.mrb[0].mxu0
  %v342 = vadd.f32 %v229, %v341
  %v343 = vpop.f32.mrb[0].mxu0
  %v344 = vpop.f32.mrb[0].mxu0
  %v345 = vadd.f32 %v229, %v344
  %v346 = vpop.f32.mrb[0].mxu0
  %347 = vmatprep.mubr.bf16.mxu0 0
  %348 = vmatmul.mubr.bf16.gmra.mrb[0].mxu0 %v262
  %v349 = vpop.f32.mrb[0].mxu0
  %v350 = vadd.f32 %v229, %v349
  %v351 = vpop.f32.mrb[0].mxu0
  %v352 = vpop.f32.mrb[0].mxu0
  %v353 = vadd.f32 %v229, %v352
  %v354 = vpop.f32.mrb[0].mxu0
  %355 = vmatprep.mubr.bf16.mxu0 0
  %356 = vmatmul.mubr.bf16.gmra.mrb[0].mxu0 %v265
  %v357 = vpop.f32.mrb[0].mxu0
  %v358 = vadd.f32 %v229, %v357
  %v359 = vpop.f32.mrb[0].mxu0
  %v360 = vpop.f32.mrb[0].mxu0
  %v361 = vadd.f32 %v229, %v360
  %v362 = vpop.f32.mrb[0].mxu0
  %363 = vdwg.mxu0
  %v364 = vtanh.pop %v302
  %v365 = vtanh.pop %v305
  %v366 = vtanh.pop %v310
  %v367 = vtanh.pop %v313
  %v368 = vtanh.pop %v318
  %v369 = vtanh.pop %v321
  %v370 = vtanh.pop %v326
  %v371 = vtanh.pop %v329
  %v372 = vtanh.pop %v334
  %v373 = vtanh.pop %v337
  %v374 = vtanh.pop %v342
  %v375 = vtanh.pop %v345
  %v376 = vtanh.pop %v350
  %v377 = vtanh.pop %v353
  %v378 = vtanh.pop %v358
  %v379 = vtanh.pop %v361
  %v380 = vpack.c.bf16 %v365, %v364
  %v381 = vpack.c.bf16 %v367, %v366
  %v382 = vpack.c.bf16 %v369, %v368
  %v383 = vpack.c.bf16 %v371, %v370
  %v384 = vpack.c.bf16 %v373, %v372
  %v385 = vpack.c.bf16 %v375, %v374
  %v386 = vpack.c.bf16 %v377, %v376
  %v387 = vpack.c.bf16 %v379, %v378
  %v388 = vld [vmem:[%s5] sm:$0xf]
  %v389 = vld [vmem:[%s5 + $0x4] sm:$0xf]
  %v390 = vld [vmem:[%s5 + $0x8] sm:$0xf]
  %v391 = vld [vmem:[%s5 + $0xc] sm:$0xf]
  %v392 = vld [vmem:[%s6] sm:$0x1]
  %v394 = vlaneseq
  %v395 = vshrl.u32 %v394, 7
  %v396 = vsub.s32 0, %v395
  %v397 = vrot.slane %v392, %v396
  %v403 = vunpack.c.l.b16 %v388
  %v404 = vunpack.c.l.b16 %v389
  %v405 = vunpack.c.l.b16 %v390
  %v406 = vunpack.c.l.b16 %v391
  %v407 = vpack.c.b16 %v404, %v403
  %v408 = vpack.c.b16 %v406, %v405
  %v412 = vsel %vm74, %v380, 0
  %v415 = vsel %vm74, %v381, 0
  %v418 = vsel %vm74, %v382, 0
  %v421 = vsel %vm74, %v383, 0
  %v424 = vsel %vm74, %v384, 0
  %v427 = vsel %vm74, %v385, 0
  %v430 = vsel %vm74, %v386, 0
  %v433 = vsel %vm74, %v387, 0
  %435 = vmatprep.subr.bf16.mxu0 0
  %436 = vmatpush1.bf16.msra.mxu0 %v407
  %437 = vmatprep.subr.bf16.mxu0 0
  %438 = vmatpush1.bf16.msra.mxu0 %v408
  %439 = vmatprep.subr.bf16.mxu0 0
  %440 = vmatpush1.bf16.msra.mxu0 0
  %441 = vmatprep.subr.bf16.mxu0 0
  %442 = vmatpush1.bf16.msra.mxu0 0
  %443 = vmatprep.subr.bf16.mxu0 0
  %444 = vmatpush1.bf16.msra.mxu0 0
  %445 = vmatprep.subr.bf16.mxu0 0
  %446 = vmatpush1.bf16.msra.mxu0 0
  %447 = vmatprep.subr.bf16.mxu0 0
  %448 = vmatpush1.bf16.msra.mxu0 0
  %449 = vmatprep.subr.bf16.mxu0 0
  %450 = vmatpush1.bf16.msra.mxu0 0
  %451 = vmatprep.subr.bf16.mxu0 0
  %452 = vmatpush1.bf16.msra.mxu0 0
  %453 = vmatprep.subr.bf16.mxu0 0
  %454 = vmatpush1.bf16.msra.mxu0 0
  %455 = vmatprep.subr.bf16.mxu0 0
  %456 = vmatpush1.bf16.msra.mxu0 0
  %457 = vmatprep.subr.bf16.mxu0 0
  %458 = vmatpush1.bf16.msra.mxu0 0
  %459 = vmatprep.subr.bf16.mxu0 0
  %460 = vmatpush1.bf16.msra.mxu0 0
  %461 = vmatprep.subr.bf16.mxu0 0
  %462 = vmatpush1.bf16.msra.mxu0 0
  %463 = vmatprep.subr.bf16.mxu0 0
  %464 = vmatpush1.bf16.msra.mxu0 0
  %465 = vmatprep.subr.bf16.mxu0 0
  %466 = vmatpush1.bf16.msra.mxu0 0
  %467 = vmatprep.mubr.bf16.mxu0 0
  %468 = vmatmul.mubr.bf16.gmra.mrb[0].mxu0 %v412
  %v469 = vpop.f32.mrb[0].mxu0
  %v470 = vadd.f32 %v397, %v469
  %v471 = vpop.f32.mrb[0].mxu0
  %v472 = vpop.f32.mrb[0].mxu0
  %v473 = vadd.f32 %v397, %v472
  %v474 = vpop.f32.mrb[0].mxu0
  %475 = vmatprep.mubr.bf16.mxu0 0
  %476 = vmatmul.mubr.bf16.gmra.mrb[0].mxu0 %v415
  %v477 = vpop.f32.mrb[0].mxu0
  %v478 = vadd.f32 %v397, %v477
  %v479 = vpop.f32.mrb[0].mxu0
  %v480 = vpop.f32.mrb[0].mxu0
  %v481 = vadd.f32 %v397, %v480
  %v482 = vpop.f32.mrb[0].mxu0
  %483 = vmatprep.mubr.bf16.mxu0 0
  %484 = vmatmul.mubr.bf16.gmra.mrb[0].mxu0 %v418
  %v485 = vpop.f32.mrb[0].mxu0
  %v486 = vadd.f32 %v397, %v485
  %v487 = vpop.f32.mrb[0].mxu0
  %v488 = vpop.f32.mrb[0].mxu0
  %v489 = vadd.f32 %v397, %v488
  %v490 = vpop.f32.mrb[0].mxu0
  %491 = vmatprep.mubr.bf16.mxu0 0
  %492 = vmatmul.mubr.bf16.gmra.mrb[0].mxu0 %v421
  %v493 = vpop.f32.mrb[0].mxu0
  %v494 = vadd.f32 %v397, %v493
  %v495 = vpop.f32.mrb[0].mxu0
  %v496 = vpop.f32.mrb[0].mxu0
  %v497 = vadd.f32 %v397, %v496
  %v498 = vpop.f32.mrb[0].mxu0
  %499 = vmatprep.mubr.bf16.mxu0 0
  %500 = vmatmul.mubr.bf16.gmra.mrb[0].mxu0 %v424
  %v501 = vpop.f32.mrb[0].mxu0
  %v502 = vadd.f32 %v397, %v501
  %v503 = vpop.f32.mrb[0].mxu0
  %v504 = vpop.f32.mrb[0].mxu0
  %v505 = vadd.f32 %v397, %v504
  %v506 = vpop.f32.mrb[0].mxu0
  %507 = vmatprep.mubr.bf16.mxu0 0
  %508 = vmatmul.mubr.bf16.gmra.mrb[0].mxu0 %v427
  %v509 = vpop.f32.mrb[0].mxu0
  %v510 = vadd.f32 %v397, %v509
  %v511 = vpop.f32.mrb[0].mxu0
  %v512 = vpop.f32.mrb[0].mxu0
  %v513 = vadd.f32 %v397, %v512
  %v514 = vpop.f32.mrb[0].mxu0
  %515 = vmatprep.mubr.bf16.mxu0 0
  %516 = vmatmul.mubr.bf16.gmra.mrb[0].mxu0 %v430
  %v517 = vpop.f32.mrb[0].mxu0
  %v518 = vadd.f32 %v397, %v517
  %v519 = vpop.f32.mrb[0].mxu0
  %v520 = vpop.f32.mrb[0].mxu0
  %v521 = vadd.f32 %v397, %v520
  %v522 = vpop.f32.mrb[0].mxu0
  %523 = vmatprep.mubr.bf16.mxu0 0
  %524 = vmatmul.mubr.bf16.gmra.mrb[0].mxu0 %v433
  %v525 = vpop.f32.mrb[0].mxu0
  %v526 = vadd.f32 %v397, %v525
  %v527 = vpop.f32.mrb[0].mxu0
  %v528 = vpop.f32.mrb[0].mxu0
  %v529 = vadd.f32 %v397, %v528
  %v530 = vpop.f32.mrb[0].mxu0
  %531 = vdwg.mxu0
  %vm532 = vcmask 64512
  %v533 = vsel %vm532, %v470, -inf
  %534 = vmax.xlane.f32.xlu0 %v533
  %v535 = vpop.xlane.xlu0 %534
  %v536 = vsel %vm532, %v473, -inf
  %537 = vmax.xlane.f32.xlu0 %v536
  %v538 = vpop.xlane.xlu0 %537
  %v539 = vsel %vm532, %v478, -inf
  %540 = vmax.xlane.f32.xlu0 %v539
  %v541 = vpop.xlane.xlu0 %540
  %v542 = vsel %vm532, %v481, -inf
  %543 = vmax.xlane.f32.xlu0 %v542
  %v544 = vpop.xlane.xlu0 %543
  %v545 = vsel %vm532, %v486, -inf
  %546 = vmax.xlane.f32.xlu0 %v545
  %v547 = vpop.xlane.xlu0 %546
  %v548 = vsel %vm532, %v489, -inf
  %549 = vmax.xlane.f32.xlu0 %v548
  %v550 = vpop.xlane.xlu0 %549
  %v551 = vsel %vm532, %v494, -inf
  %552 = vmax.xlane.f32.xlu0 %v551
  %v553 = vpop.xlane.xlu0 %552
  %v554 = vsel %vm532, %v497, -inf
  %555 = vmax.xlane.f32.xlu0 %v554
  %v556 = vpop.xlane.xlu0 %555
  %v557 = vsel %vm532, %v502, -inf
  %558 = vmax.xlane.f32.xlu0 %v557
  %v559 = vpop.xlane.xlu0 %558
  %v560 = vsel %vm532, %v505, -inf
  %561 = vmax.xlane.f32.xlu0 %v560
  %v562 = vpop.xlane.xlu0 %561
  %v563 = vsel %vm532, %v510, -inf
  %564 = vmax.xlane.f32.xlu0 %v563
  %v565 = vpop.xlane.xlu0 %564
  %v566 = vsel %vm532, %v513, -inf
  %567 = vmax.xlane.f32.xlu0 %v566
  %v568 = vpop.xlane.xlu0 %567
  %v569 = vsel %vm532, %v518, -inf
  %570 = vmax.xlane.f32.xlu0 %v569
  %v571 = vpop.xlane.xlu0 %570
  %v572 = vsel %vm532, %v521, -inf
  %573 = vmax.xlane.f32.xlu0 %v572
  %v574 = vpop.xlane.xlu0 %573
  %v575 = vsel %vm532, %v526, -inf
  %576 = vmax.xlane.f32.xlu0 %v575
  %v577 = vpop.xlane.xlu0 %576
  %v578 = vsel %vm532, %v529, -inf
  %579 = vmax.xlane.f32.xlu0 %v578
  %v580 = vpop.xlane.xlu0 %579
  %v581 = vsub.f32 %v470, %v535
  %v582 = vsub.f32 %v473, %v538
  %v583 = vsub.f32 %v478, %v541
  %v584 = vsub.f32 %v481, %v544
  %v585 = vsub.f32 %v486, %v547
  %v586 = vsub.f32 %v489, %v550
  %v587 = vsub.f32 %v494, %v553
  %v588 = vsub.f32 %v497, %v556
  %v589 = vsub.f32 %v502, %v559
  %v590 = vsub.f32 %v505, %v562
  %v591 = vsub.f32 %v510, %v565
  %v592 = vsub.f32 %v513, %v568
  %v593 = vsub.f32 %v518, %v571
  %v594 = vsub.f32 %v521, %v574
  %v595 = vsub.f32 %v526, %v577
  %v596 = vsub.f32 %v529, %v580
  %v597 = vmul.f32 %v581, 1.442695
  %v598 = vpow.pop %v597
  %v599 = vmul.f32 %v582, 1.442695
  %v600 = vpow.pop %v599
  %v601 = vmul.f32 %v583, 1.442695
  %v602 = vpow.pop %v601
  %v603 = vmul.f32 %v584, 1.442695
  %v604 = vpow.pop %v603
  %v605 = vmul.f32 %v585, 1.442695
  %v606 = vpow.pop %v605
  %v607 = vmul.f32 %v586, 1.442695
  %v608 = vpow.pop %v607
  %v609 = vmul.f32 %v587, 1.442695
  %v610 = vpow.pop %v609
  %v611 = vmul.f32 %v588, 1.442695
  %v612 = vpow.pop %v611
  %v613 = vmul.f32 %v589, 1.442695
  %v614 = vpow.pop %v613
  %v615 = vmul.f32 %v590, 1.442695
  %v616 = vpow.pop %v615
  %v617 = vmul.f32 %v591, 1.442695
  %v618 = vpow.pop %v617
  %v619 = vmul.f32 %v592, 1.442695
  %v620 = vpow.pop %v619
  %v621 = vmul.f32 %v593, 1.442695
  %v622 = vpow.pop %v621
  %v623 = vmul.f32 %v594, 1.442695
  %v624 = vpow.pop %v623
  %v625 = vmul.f32 %v595, 1.442695
  %v626 = vpow.pop %v625
  %v627 = vmul.f32 %v596, 1.442695
  %v628 = vpow.pop %v627
  %v629 = vsel %vm532, %v598, 0.0
  %630 = vadd.xlane.f32.xlu0 %v629
  %v631 = vpop.xlane.xlu0 %630
  %v632 = vsel %vm532, %v600, 0.0
  %633 = vadd.xlane.f32.xlu0 %v632
  %v634 = vpop.xlane.xlu0 %633
  %v635 = vsel %vm532, %v602, 0.0
  %636 = vadd.xlane.f32.xlu0 %v635
  %v637 = vpop.xlane.xlu0 %636
  %v638 = vsel %vm532, %v604, 0.0
  %639 = vadd.xlane.f32.xlu0 %v638
  %v640 = vpop.xlane.xlu0 %639
  %v641 = vsel %vm532, %v606, 0.0
  %642 = vadd.xlane.f32.xlu0 %v641
  %v643 = vpop.xlane.xlu0 %642
  %v644 = vsel %vm532, %v608, 0.0
  %645 = vadd.xlane.f32.xlu0 %v644
  %v646 = vpop.xlane.xlu0 %645
  %v647 = vsel %vm532, %v610, 0.0
  %648 = vadd.xlane.f32.xlu0 %v647
  %v649 = vpop.xlane.xlu0 %648
  %v650 = vsel %vm532, %v612, 0.0
  %651 = vadd.xlane.f32.xlu0 %v650
  %v652 = vpop.xlane.xlu0 %651
  %v653 = vsel %vm532, %v614, 0.0
  %654 = vadd.xlane.f32.xlu0 %v653
  %v655 = vpop.xlane.xlu0 %654
  %v656 = vsel %vm532, %v616, 0.0
  %657 = vadd.xlane.f32.xlu0 %v656
  %v658 = vpop.xlane.xlu0 %657
  %v659 = vsel %vm532, %v618, 0.0
  %660 = vadd.xlane.f32.xlu0 %v659
  %v661 = vpop.xlane.xlu0 %660
  %v662 = vsel %vm532, %v620, 0.0
  %663 = vadd.xlane.f32.xlu0 %v662
  %v664 = vpop.xlane.xlu0 %663
  %v665 = vsel %vm532, %v622, 0.0
  %666 = vadd.xlane.f32.xlu0 %v665
  %v667 = vpop.xlane.xlu0 %666
  %v668 = vsel %vm532, %v624, 0.0
  %669 = vadd.xlane.f32.xlu0 %v668
  %v670 = vpop.xlane.xlu0 %669
  %v671 = vsel %vm532, %v626, 0.0
  %672 = vadd.xlane.f32.xlu0 %v671
  %v673 = vpop.xlane.xlu0 %672
  %v674 = vsel %vm532, %v628, 0.0
  %675 = vadd.xlane.f32.xlu0 %v674
  %v676 = vpop.xlane.xlu0 %675
  %v677 = vrcp.pop %v631
  %v678 = vmul.f32 %v598, %v677
  %v679 = vrcp.pop %v634
  %v680 = vmul.f32 %v600, %v679
  %v681 = vrcp.pop %v637
  %v682 = vmul.f32 %v602, %v681
  %v683 = vrcp.pop %v640
  %v684 = vmul.f32 %v604, %v683
  %v685 = vrcp.pop %v643
  %v686 = vmul.f32 %v606, %v685
  %v687 = vrcp.pop %v646
  %v688 = vmul.f32 %v608, %v687
  %v689 = vrcp.pop %v649
  %v690 = vmul.f32 %v610, %v689
  %v691 = vrcp.pop %v652
  %v692 = vmul.f32 %v612, %v691
  %v693 = vrcp.pop %v655
  %v694 = vmul.f32 %v614, %v693
  %v695 = vrcp.pop %v658
  %v696 = vmul.f32 %v616, %v695
  %v697 = vrcp.pop %v661
  %v698 = vmul.f32 %v618, %v697
  %v699 = vrcp.pop %v664
  %v700 = vmul.f32 %v620, %v699
  %v701 = vrcp.pop %v667
  %v702 = vmul.f32 %v622, %v701
  %v703 = vrcp.pop %v670
  %v704 = vmul.f32 %v624, %v703
  %v705 = vrcp.pop %v673
  %v706 = vmul.f32 %v626, %v705
  %v707 = vrcp.pop %v676
  %v708 = vmul.f32 %v628, %v707
  %709 = vst.msk [vmem:[%s7] sm:$0xff] %vm532, %v678
  %710 = vst.msk [vmem:[%s7 + $0x8] sm:$0xff] %vm532, %v680
  %711 = vst.msk [vmem:[%s7 + $0x10] sm:$0xff] %vm532, %v682
  %712 = vst.msk [vmem:[%s7 + $0x18] sm:$0xff] %vm532, %v684
  %713 = vst.msk [vmem:[%s7 + $0x20] sm:$0xff] %vm532, %v686
  %714 = vst.msk [vmem:[%s7 + $0x28] sm:$0xff] %vm532, %v688
  %715 = vst.msk [vmem:[%s7 + $0x30] sm:$0xff] %vm532, %v690
  %716 = vst.msk [vmem:[%s7 + $0x38] sm:$0xff] %vm532, %v692
  %717 = vst.msk [vmem:[%s7 + $0x40] sm:$0xff] %vm532, %v694
  %718 = vst.msk [vmem:[%s7 + $0x48] sm:$0xff] %vm532, %v696
  %719 = vst.msk [vmem:[%s7 + $0x50] sm:$0xff] %vm532, %v698
  %720 = vst.msk [vmem:[%s7 + $0x58] sm:$0xff] %vm532, %v700
  %721 = vst.msk [vmem:[%s7 + $0x60] sm:$0xff] %vm532, %v702
  %722 = vst.msk [vmem:[%s7 + $0x68] sm:$0xff] %vm532, %v704
  %723 = vst.msk [vmem:[%s7 + $0x70] sm:$0xff] %vm532, %v706
  %724 = vst.msk [vmem:[%s7 + $0x78] sm:$0xff] %vm532, %v708
  // Predicated region
  $region30: #{_forward.1} parent=0 // pred_check
    _
  $region31: #{_forward.1} parent=0 // pred_check_branch
    %726 = sbr.rel (0) target = $region33
  $region32: #{_forward.1} parent=0 // pred_region
    _
  $region33: #{_forward.1} parent=0 // pred_fallthru
    _
  // Predicated region
  $region34: #{_forward.1} parent=0 // pred_check
    _
  $region35: #{_forward.1} parent=0 // pred_check_branch
    %728 = sbr.rel (0) target = $region37
  $region36: #{_forward.1} parent=0 // pred_region
    _
  $region37: #{_forward.1} parent=0 // pred_fallthru
    _

</llo_original>
